<compile_context>
chip_gen: v6e
topology: v6e:2x2x1
jax: 0.10.0
libtpu: 0.0.40
codegen_flags: <defaults>
</compile_context>

<pallas_src>
import functools

import jax
import jax.numpy as jnp
from jax import lax
from jax.experimental import pallas as pl
from jax.experimental.pallas import tpu as pltpu


def _avg_readout_kernel(seq_ref, out_ref, *scratch, n_total, tile_n, mask_last):
    # seq_ref: (TB, TN, TD) VMEM tile; out_ref: (TB, TD).
    # scratch (optional): (TB, TD) float32 accumulator for non-f32 inputs;
    # for f32 inputs we accumulate directly into the resident output block.
    acc_ref = scratch[0] if scratch else out_ref
    n = pl.program_id(2)
    is_last = n == pl.num_programs(2) - 1

    @pl.when(n == 0)
    def _init():
        acc_ref[...] = jnp.zeros_like(acc_ref)

    def _accumulate(seq):
        acc_ref[...] += jnp.sum(seq, axis=1, dtype=jnp.float32).astype(acc_ref.dtype)

    if mask_last:
        # Masking is only needed for the padded rows of the final partial N
        # tile; gate it so the steady-state steps stay mask-free.
        @pl.when(is_last)
        def _masked_step():
            seq = seq_ref[...]
            row_ids = lax.broadcasted_iota(jnp.int32, (1, tile_n, 1), 1)
            valid = row_ids < (n_total - n * tile_n)
            _accumulate(jnp.where(valid, seq, jnp.zeros((), seq.dtype)))

        @pl.when(jnp.logical_not(is_last))
        def _plain_step():
            _accumulate(seq_ref[...])
    else:
        _accumulate(seq_ref[...])

    @pl.when(is_last)
    def _finalize():
        out_ref[...] = (
            acc_ref[...].astype(jnp.float32) * jnp.float32(1.0 / n_total)
        ).astype(out_ref.dtype)


def _sublane_multiple(dtype) -> int:
    itemsize = jnp.dtype(dtype).itemsize
    if itemsize >= 4:
        return 8
    if itemsize == 2:
        return 16
    return 32


def _vmem_budget():
    """Return (per-input-tile target bytes, vmem_limit_bytes).

    Conservative (v7x-safe) defaults unless we can see >=128 MiB VMEM.
    """
    vmem_cap = 64 * 1024 * 1024
    try:
        info = pltpu.get_tpu_info()
        vmem_cap = int(getattr(info, "vmem_capacity_bytes", vmem_cap))
    except Exception:
        pass
    if vmem_cap >= 128 * 1024 * 1024:  # v5e / v6e
        return 8 * 1024 * 1024, 64 * 1024 * 1024
    return 4 * 1024 * 1024, 32 * 1024 * 1024  # v7x or unknown


def _choose_tiles(B, N, D, dtype, target_bytes):
    """Pick (TB, TN, TD): (8,128)-legal, ~target_bytes per input tile."""
    itemsize = jnp.dtype(dtype).itemsize
    sub = _sublane_multiple(dtype)

    # Batch tile: sublane-dense multiple of 8 when B allows, else full B
    # (full-dim blocks are always legal). TB divides B -> no batch padding.
    TB = 8 if (B >= 8 and B % 8 == 0) else B

    # Feature tile: split D in half when the batch axis gives only a single
    # parallel grid step, so both v7x TensorCores get work. Only when the
    # halves stay lane-dense multiples of 128.
    TD = D
    if (B // max(TB, 1)) < 2 and D >= 256 and D % 256 == 0:
        TD = D // 2

    # Reduction tile: as many N rows as fit the per-buffer budget, rounded to
    # the dtype-native sublane multiple; prefer a TN dividing N exactly so the
    # masked remainder path vanishes.
    bytes_per_n_row = max(1, TB * TD * itemsize)
    rows_budget = max(1, target_bytes // bytes_per_n_row)
    if N <= rows_budget:
        TN = N
    else:
        TN = max(sub, (rows_budget // sub) * sub)
        lo = max(sub, (TN // 2 // sub) * sub)
        cand = TN
        while cand >= lo:
            if N % cand == 0:
                TN = cand
                break
            cand -= sub
    return TB, TN, TD


def avg_readout(
    seq: jax.Array,
    *,
    force_pallas: bool = False,
    target_bytes: int | None = None,
    vmem_limit_bytes: int | None = None,
    min_pallas_bytes: int = 1 << 20,
) -> jax.Array:
    """Pallas implementation of AvgReadout: mean over axis 1 of (B, N, D)."""
    B, N, D = seq.shape
    itemsize = jnp.dtype(seq.dtype).itemsize
    total_bytes = B * N * D * itemsize

    # Micro-shapes: fixed pallas_call launch overhead dominates; let XLA fuse.
    if not force_pallas and total_bytes < min_pallas_bytes:
        return jnp.mean(seq, axis=1)

    default_target, default_vmem = _vmem_budget()
    if target_bytes is None:
        target_bytes = default_target
    if vmem_limit_bytes is None:
        vmem_limit_bytes = default_vmem

    TB, TN, TD = _choose_tiles(B, N, D, seq.dtype, target_bytes)
    n_steps = pl.cdiv(N, TN)
    grid = (pl.cdiv(B, TB), pl.cdiv(D, TD), n_steps)
    mask_last = (N % TN) != 0

    # f32 inputs accumulate directly in the resident output block; narrower
    # dtypes get a dedicated f32 scratch accumulator.
    use_scratch = seq.dtype != jnp.float32
    scratch_shapes = [pltpu.VMEM((TB, TD), jnp.float32)] if use_scratch else []

    # Shallow reduction tiles: deepen input buffering to hide DMA issue latency.
    in_spec_kwargs = {}
    buffered = getattr(pl, "Buffered", None)
    if buffered is not None and TN <= 16 and n_steps >= 3:
        in_spec_kwargs["pipeline_mode"] = buffered(3)

    kernel = functools.partial(
        _avg_readout_kernel, n_total=N, tile_n=TN, mask_last=mask_last
    )

    cost = pl.CostEstimate(
        flops=B * N * D + B * D,
        transcendentals=0,
        bytes_accessed=B * N * D * itemsize + B * D * itemsize,
    )

    return pl.pallas_call(
        kernel,
        out_shape=jax.ShapeDtypeStruct((B, D), seq.dtype),
        grid_spec=pltpu.PrefetchScalarGridSpec(
            num_scalar_prefetch=0,
            grid=grid,
            in_specs=[
                pl.BlockSpec((TB, TN, TD), lambda b, d, n: (b, n, d), **in_spec_kwargs),
            ],
            # Same output block across the N axis -> resident accumulator tile.
            out_specs=pl.BlockSpec((TB, TD), lambda b, d, n: (b, d)),
            scratch_shapes=scratch_shapes,
        ),
        compiler_params=pltpu.CompilerParams(
            dimension_semantics=("parallel", "parallel", "arbitrary"),
            vmem_limit_bytes=vmem_limit_bytes,
        ),
        cost_estimate=cost,
    )(seq)


if __name__ == "__main__":
    key = jax.random.PRNGKey(0)

    # Module-scale shape (batch=2, seq_len=8, hidden=32), forced through the
    # Pallas path so the kernel itself is exercised.
    B, N, D = 2, 8, 32
    seq = jax.random.normal(key, (B, N, D), dtype=jnp.float32)
    out = jax.block_until_ready(avg_readout(seq, force_pallas=True))
    ref = jnp.mean(seq, axis=1)
    assert out.shape == (B, D), out.shape
    assert jnp.allclose(out, ref, atol=1e-6, rtol=1e-6), "f32 mismatch vs reference"

    # Larger bf16 case: tiny target_bytes forces multiple N steps, the gated
    # remainder masking (N=100 not a multiple of TN), the f32 scratch
    # accumulator and the D-split parallel axis.
    B2, N2, D2 = 8, 100, 256
    seq2 = jax.random.normal(
        jax.random.PRNGKey(1), (B2, N2, D2), dtype=jnp.float32
    ).astype(jnp.bfloat16)
    out2 = jax.block_until_ready(
        avg_readout(seq2, force_pallas=True, target_bytes=64 * 1024)
    )
    ref2 = jnp.mean(seq2.astype(jnp.float32), axis=1)
    assert out2.shape == (B2, D2), out2.shape
    assert jnp.allclose(
        out2.astype(jnp.float32), ref2, atol=2e-2, rtol=2e-2
    ), "bf16 mismatch vs reference"

    print("KERNEL_OK")
</pallas_src>

<mosaic_0001>
module attributes {stable_mosaic.version = 11 : i64} {
  func.func @_avg_readout_kernel(%arg0: i32, %arg1: i32, %arg2: i32, %arg3: memref<2x8x32xf32, #tpu.memory_space<vmem>>, %arg4: memref<2x32xf32, #tpu.memory_space<vmem>>) attributes {dimension_semantics = [#tpu.dimension_semantics<parallel>, #tpu.dimension_semantics<parallel>, #tpu.dimension_semantics<arbitrary>], iteration_bounds = array<i64: 1, 1, 1>, scalar_prefetch = 0 : i64, scratch_operands = 0 : i64, tpu.core_type = #tpu.core_type<tc>, window_params = [{transform_indices = @transform_0, window_bounds = array<i64: 2, 8, 32>}, {transform_indices = @transform_1, window_bounds = array<i64: 2, 32>}]} {
    %c0_i32 = arith.constant 0 : i32
    %0 = arith.cmpi eq, %arg2, %c0_i32 : i32
    %c0_i32_0 = arith.constant 0 : i32
    %1 = arith.cmpi eq, %arg2, %c0_i32_0 : i32
    %2 = arith.extui %1 : i1 to i32
    %c0_i32_1 = arith.constant 0 : i32
    %3 = arith.cmpi ne, %2, %c0_i32_1 : i32
    scf.if %3 {
      %cst_9 = arith.constant 0.000000e+00 : f32
      %11 = vector.broadcast %cst_9 : f32 to vector<2x32xf32>
      %c0_10 = arith.constant 0 : index
      %c0_11 = arith.constant 0 : index
      %12 = vector.load %arg4[%c0_10, %c0_11] : memref<2x32xf32, #tpu.memory_space<vmem>>, vector<2x32xf32>
      tpu.vector_store %arg4[%c0_10, %c0_11], %11 {strides = array<i32>} : memref<2x32xf32, #tpu.memory_space<vmem>>, vector<2x32xf32>,
    } else {
    }
    %c0 = arith.constant 0 : index
    %c0_2 = arith.constant 0 : index
    %c0_3 = arith.constant 0 : index
    %4 = vector.load %arg3[%c0, %c0_2, %c0_3] : memref<2x8x32xf32, #tpu.memory_space<vmem>>, vector<2x8x32xf32>
    %c0_4 = arith.constant 0 : index
    %c0_5 = arith.constant 0 : index
    %5 = vector.load %arg4[%c0_4, %c0_5] : memref<2x32xf32, #tpu.memory_space<vmem>>, vector<2x32xf32>
    %cst = arith.constant dense<0.000000e+00> : vector<2x32xf32>
    %6 = vector.multi_reduction <add>, %4, %cst [1] : vector<2x8x32xf32> to vector<2x32xf32>
    %7 = arith.addf %5, %6 : vector<2x32xf32>
    %c0_6 = arith.constant 0 : index
    %c0_7 = arith.constant 0 : index
    %8 = vector.load %arg4[%c0_6, %c0_7] : memref<2x32xf32, #tpu.memory_space<vmem>>, vector<2x32xf32>
    tpu.vector_store %arg4[%c0_6, %c0_7], %7 {strides = array<i32>} : memref<2x32xf32, #tpu.memory_space<vmem>>, vector<2x32xf32>,
    %9 = arith.extui %0 : i1 to i32
    %c0_i32_8 = arith.constant 0 : i32
    %10 = arith.cmpi ne, %9, %c0_i32_8 : i32
    scf.if %10 {
      %c0_9 = arith.constant 0 : index
      %c0_10 = arith.constant 0 : index
      %11 = vector.load %arg4[%c0_9, %c0_10] : memref<2x32xf32, #tpu.memory_space<vmem>>, vector<2x32xf32>
      %cst_11 = arith.constant 1.250000e-01 : f32
      %12 = vector.broadcast %cst_11 : f32 to vector<2x32xf32>
      %13 = arith.mulf %11, %12 : vector<2x32xf32>
      %c0_12 = arith.constant 0 : index
      %c0_13 = arith.constant 0 : index
      %14 = vector.load %arg4[%c0_12, %c0_13] : memref<2x32xf32, #tpu.memory_space<vmem>>, vector<2x32xf32>
      tpu.vector_store %arg4[%c0_12, %c0_13], %13 {strides = array<i32>} : memref<2x32xf32, #tpu.memory_space<vmem>>, vector<2x32xf32>,
    } else {
    }
    return
  }
  func.func @transform_0(%arg0: i32, %arg1: i32, %arg2: i32) -> (i32, i32, i32) {
    %c0_i32 = arith.constant 0 : i32
    return %arg0, %arg2, %arg1 : i32, i32, i32
  }
  func.func @transform_1(%arg0: i32, %arg1: i32, %arg2: i32) -> (i32, i32) {
    %c0_i32 = arith.constant 0 : i32
    return %arg0, %arg1 : i32, i32
  }
}

</mosaic_0001>

<llo_original>
// kernel: tpu_custom_call.1
$region0: #{tpu_custom_call.1}
  #allocation0 [shape = 'u32[]', space=smem, size = 0x4, offset = 0x4, fixed_abs, tag = 'smem constant byte address 0x4 - core index']
  #allocation1 [shape = 'u32[144,128]{1,0:T(1,128)}', space=vmem, size = 0x12000, scoped, tag = 'internal scratch']
  %s0 = inlined_call_operand.hbm [shape: f32[2,8,32], index: 0, kind: input, shape index: {}]
  %s1 = inlined_call_operand.hbm [shape: f32[2,32], index: 1, kind: output, shape index: {}]
  %s2 = sld [smem:[#allocation0]]
  $region26: #{tpu_custom_call.1} parent=0
    _
  %s4 = ssub.s32 1, %s2
  %s5 = scalar_select 0, %s4, %s2
  $region1: #{tpu_custom_call.1} parent=0
    #allocation2 [shape = 'u8[8192]{0}', space=vmem, size = 0x2000, scoped, tag = 'input window, operand 0, single buffered']
    #allocation3 [shape = 's32[1]{0}', space=sflag, size = 0x4, scoped, tag = 'scoped memory for tpu_custom_call.1']
    #allocation4 [shape = 's32[1]{0}', space=sflag, size = 0x4, scoped, tag = 'scoped memory for tpu_custom_call.1']
    #allocation5 [shape = 'u8[1024]{0}', space=vmem, size = 0x400, scoped, tag = 'output window, operand 0, single buffered']
    %6 = vsyncpa [#allocation3], 0
    %7 = vsyncpa [#allocation4], 0
    // Predicated region
    $region2: #{tpu_custom_call.1} parent=1 // pred_check
      _
    $region3: #{tpu_custom_call.1} parent=1 // pred_check_branch
      %9 = sbr.rel (0) target = $region5
    $region4: #{tpu_custom_call.1} parent=1 // pred_region
      %s11 = ssub.s32 256, 256
      %12 = vsyncadd [#allocation3], %s11
      %s13 = sshll.u32 [#allocation2], 4
      %s14 = int_to_ptr.vmem [resolvable:$true] %s13
      %19 = dma.hbm_to_vmem [thread:$0]  %s0, 256, %s14, [#allocation3], 128, 128, 8
    $region5: #{tpu_custom_call.1} parent=1 // pred_fallthru
      _
    // Predicated region
    $region6: #{tpu_custom_call.1} parent=1 // pred_check
      _
    $region7: #{tpu_custom_call.1} parent=1 // pred_check_branch
      %21 = sbr.rel (0) target = $region9
    $region8: #{tpu_custom_call.1} parent=1 // pred_region
      %22 = dma.done [#allocation3], 256
    $region9: #{tpu_custom_call.1} parent=1 // pred_fallthru
      _
    %p23 = scmp.eq.s32.totalorder 0, 0
    // Predicated region
    $region10: #{tpu_custom_call.1} parent=1 // pred_check
      %p24 = pneg %p23
    $region11: #{tpu_custom_call.1} parent=1 // pred_check_branch
      %26 = sbr.rel (%p24) target = $region13
    $region12: #{tpu_custom_call.1} parent=1 // pred_region
      %vm27 = vcmask 254976
      %28 = vst.msk [vmem:[#allocation5] sm:$0x3] %vm27, 0.0
    $region13: #{tpu_custom_call.1} parent=1 // pred_fallthru
      _
    %v29 = vld [vmem:[#allocation2] sm:$0xff]
    %v30 = vld [vmem:[#allocation2 + $0x8] sm:$0xff]
    %v31 = vld [vmem:[#allocation5] sm:$0x3]
    %vm32 = vcmask 261120
    %v33 = vsel %vm32, %v29, 0.0
    %v34 = vrot.slane %v33, 4
    %v35 = vadd.f32 %v33, %v34
    %v36 = vrot.slane %v35, 2
    %v37 = vadd.f32 %v35, %v36
    %v38 = vrot.slane %v37, 1
    %v39 = vadd.f32 %v37, %v38
    %v40 = vsel %vm32, %v30, 0.0
    %v41 = vrot.slane %v40, 4
    %v42 = vadd.f32 %v40, %v41
    %v43 = vrot.slane %v42, 2
    %v44 = vadd.f32 %v42, %v43
    %v45 = vrot.slane %v44, 1
    %v46 = vadd.f32 %v44, %v45
    %vm49 = vcmask 1041409
    %v50 = vsel %vm49, %v46, %v39
    %v52 = vadd.f32 %v31, %v50
    %vm53 = vcmask 254976
    %54 = vst.msk [vmem:[#allocation5] sm:$0x3] %vm53, %v52
    // Predicated region
    $region14: #{tpu_custom_call.1} parent=1 // pred_check
      %p55 = pneg %p23
    $region15: #{tpu_custom_call.1} parent=1 // pred_check_branch
      %57 = sbr.rel (%p55) target = $region17
    $region16: #{tpu_custom_call.1} parent=1 // pred_region
      %v58 = vld [vmem:[#allocation5] sm:$0x3]
      %v59 = vmul.f32 %v58, 0.125
      %60 = vst.msk [vmem:[#allocation5] sm:$0x3] %vm53, %v59
    $region17: #{tpu_custom_call.1} parent=1 // pred_fallthru
      _
    // Predicated region
    $region18: #{tpu_custom_call.1} parent=1 // pred_check
      _
    $region19: #{tpu_custom_call.1} parent=1 // pred_check_branch
      %62 = sbr.rel (0) target = $region21
    $region20: #{tpu_custom_call.1} parent=1 // pred_region
      %s64 = ssub.s32 32, 32
      %65 = vsyncadd [#allocation4], %s64
      %s67 = sshll.u32 [#allocation5], 4
      %s68 = int_to_ptr.vmem [resolvable:$true] %s67
      %70 = dma.vmem_to_hbm [thread:$0]  %s68, 32, %s1, [#allocation4]
    $region21: #{tpu_custom_call.1} parent=1 // pred_fallthru
      _
    // Predicated region
    $region22: #{tpu_custom_call.1} parent=1 // pred_check
      _
    $region23: #{tpu_custom_call.1} parent=1 // pred_check_branch
      %72 = sbr.rel (0) target = $region25
    $region24: #{tpu_custom_call.1} parent=1 // pred_region
      %73 = dma.done [#allocation4], 32
    $region25: #{tpu_custom_call.1} parent=1 // pred_fallthru
      _
    %74 = vsyncpa [#allocation3], 1
    %75 = vsyncpa [#allocation4], 1

</llo_original>
